<compile_context>
chip_gen: v6e
topology: v6e:2x2x1
jax: 0.10.0
libtpu: 0.0.40
codegen_flags: <defaults>
</compile_context>

<pallas_src>
import jax
import jax.numpy as jnp
import numpy as np
from jax.experimental import pallas as pl
from jax.experimental.pallas import tpu as pltpu


def _ceil_to(n, m):
    return ((n + m - 1) // m) * m


def _pad2(a, rows, cols):
    return jnp.pad(a, ((0, rows - a.shape[0]), (0, cols - a.shape[1])))


# ----------------------------------------------------------------------------
# Pallas kernel: fused 5-layer MLP view_transformer (eval mode, bf16 MXU path)
# ----------------------------------------------------------------------------
def _view_transformer_kernel(sf_ref, ae_ref, w1s_ref, w1a_ref, w2_ref, w3_ref,
                             w45_ref, bias_ref, out_ref):
    f32 = jnp.float32
    bf16 = jnp.bfloat16

    # Static widths derived from the (padded) weight blocks.
    n1 = w1s_ref.shape[1]
    n2 = w2_ref.shape[1]
    n3 = w3_ref.shape[1]
    split = w45_ref.shape[0]                # = layer-4 output width (padded)
    n5 = w45_ref.shape[1] - split           # = layer-5 output width (padded)

    # Single packed bias block (8, Wb) -> static row/lane slices (all zero-padded).
    biases = bias_ref[...].astype(f32)
    b1 = biases[0:1, :n1]
    b2 = biases[1:2, :n2]
    b3 = biases[2:3, :n3]
    b4 = biases[3:4, :split]
    b5 = biases[4:5, :n5]

    # Fused (K, N4+N5) block -> two 128-aligned lane slices.
    w45 = w45_ref[...]
    w4 = w45[:, :split]
    w5 = w45[:, split:]

    def mm(h, w):
        # Native bf16 x bf16 -> f32 accumulation on the MXU (no weight upcast).
        return jnp.dot(h, w, preferred_element_type=f32)

    # Layer 1 (split-K): shape-feature K block + (padded) azim/elev K block.
    h = jnp.maximum(mm(sf_ref[...], w1s_ref[...])
                    + mm(ae_ref[...], w1a_ref[...]) + b1, 0.0)
    h = jnp.maximum(mm(h.astype(bf16), w2_ref[...]) + b2, 0.0)
    h = jnp.maximum(mm(h.astype(bf16), w3_ref[...]) + b3, 0.0)
    h = jnp.maximum(mm(h.astype(bf16), w4) + b4, 0.0)
    # Lane-dense (tile_b, n5) f32 output slab; padded lanes hold tanh(0) = 0.
    out_ref[...] = jnp.tanh(mm(h.astype(bf16), w5) + b5)


# ----------------------------------------------------------------------------
# pallas_call wrapper
# ----------------------------------------------------------------------------
def view_transformer_forward(shape_features, c_azim, c_elev, kernel_params,
                             *, S, V, Sp, AEp, Hout_p):
    """Runs the fused MLP; returns the raw (B, 2V) tanh adjustment vector."""
    B = shape_features.shape[0]
    bf16 = jnp.bfloat16

    # bf16 activation stream (halves activation DMA; f32 accumulation in-kernel).
    sf = shape_features.astype(bf16)
    if Sp != S:                                       # only if S % 128 != 0
        sf = jnp.pad(sf, ((0, 0), (0, Sp - S)))
    ae = jnp.concatenate([c_azim, c_elev], axis=1).astype(bf16)   # (B, 2V) tiny
    ae = jnp.pad(ae, ((0, 0), (0, AEp - 2 * V)))

    # Batch tiling: 8-row sublane alignment; >= 2 grid steps at moderate B so
    # the "parallel" batch axis shards across both v7x TensorCores; tiles up to
    # 512 rows to fill the 256x256 MXUs on v6e/v7x.
    if B <= 16:
        tile_b = 8
    else:
        tile_b = min(512, _ceil_to(pl.cdiv(B, 2), 8))

    if B < tile_b:                 # only tiny batches pay a (cheap) row pad;
        pad_rows = tile_b - B      # large B is fed unpadded (ragged last tile).
        sf = jnp.pad(sf, ((0, pad_rows), (0, 0)))
        ae = jnp.pad(ae, ((0, pad_rows), (0, 0)))
    B_eff = sf.shape[0]
    grid = (pl.cdiv(B_eff, tile_b),)

    def row_spec(width):                       # activation / output tiles
        return pl.BlockSpec((tile_b, width), lambda i: (i, 0))

    def pinned(p):                             # weights stay VMEM-resident
        return pl.BlockSpec(p.shape, lambda i: (0, 0))

    in_specs = [row_spec(Sp), row_spec(AEp)] + [pinned(p) for p in kernel_params]
    out_spec = row_spec(Hout_p)

    w_bytes = int(sum(int(p.size) * p.dtype.itemsize for p in kernel_params))
    flops = int(2 * B_eff * sum(int(p.shape[0] * p.shape[1])
                                for p in kernel_params[:5]))
    cost = pl.CostEstimate(
        flops=flops,
        transcendentals=int(B_eff * Hout_p),
        bytes_accessed=int(w_bytes + sf.size * 2 + ae.size * 2
                           + B_eff * Hout_p * 4))

    out = pl.pallas_call(
        _view_transformer_kernel,
        out_shape=jax.ShapeDtypeStruct((B_eff, Hout_p), jnp.float32),
        grid_spec=pltpu.PrefetchScalarGridSpec(
            num_scalar_prefetch=0,
            grid=grid,
            in_specs=in_specs,
            out_specs=out_spec),
        compiler_params=pltpu.CompilerParams(
            dimension_semantics=("parallel",)),
        cost_estimate=cost,
    )(sf, ae, *kernel_params)

    return out[:B, :2 * V]


# ----------------------------------------------------------------------------
# Module (JAX/Pallas port of LearnedRandomViewSelector)
# ----------------------------------------------------------------------------
class LearnedRandomViewSelector:
    def __init__(self, nb_views=12, canonical_distance=2.2,
                 shape_features_size=512, transform_distance=False,
                 input_view_noise=0.0, key=None):
        if transform_distance:
            # TODO(synk): transform_distance=True (3V head + distance jitter).
            raise NotImplementedError(
                "transform_distance=True not implemented in this Pallas port")
        self.nb_views = nb_views
        self.canonical_distance = canonical_distance
        self.shape_features_size = shape_features_size
        self.transform_distance = transform_distance
        self.input_view_noise = input_view_noise   # unused in forward (as in torch)

        V = nb_views
        self.views_azim = jnp.zeros((1, V), jnp.float32)
        self.views_elev = jnp.zeros((1, V), jnp.float32)
        self.views_dist = jnp.ones((1, V), jnp.float32) * canonical_distance

        self._init_view_transformer(key if key is not None else jax.random.PRNGKey(0))

    # ------------------------------------------------------------------ params
    def _init_view_transformer(self, key):
        """Synthetic eval-mode weights: BN identity stats folded, bf16 storage,
        split/padded/fused into the 6-block lane-dense kernel layout."""
        S, V = self.shape_features_size, self.nb_views
        dims = [S + 2 * V, S, S, 5 * V, 2 * V, 2 * V]
        bn_fold = 1.0 / np.sqrt(1.0 + 1e-5)   # eval BatchNorm1d: mean=0,var=1,eps=1e-5

        raw = []
        for i in range(5):
            key, kw, kb = jax.random.split(key, 3)
            fi, fo = dims[i], dims[i + 1]
            w = jax.random.normal(kw, (fi, fo), jnp.float32) * np.sqrt(2.0 / fi)
            b = jax.random.normal(kb, (1, fo), jnp.float32) * 0.01
            if i == 0:
                # Synthetic-weight conditioning: the MLP input mixes unit-scale
                # shape features with degree-valued azim/elev (|x| up to 180);
                # scale those rows so activations stay O(1) for the test.
                w = w.at[S:S + V, :].multiply(1.0 / 180.0)
                w = w.at[S + V:, :].multiply(1.0 / 90.0)
            if i < 4:                          # layers carrying BatchNorm1d
                w = w * bn_fold
                b = b * bn_fold
            # bf16 round-trip so kernel (bf16 storage) and reference agree.
            w = w.astype(jnp.bfloat16).astype(jnp.float32)
            b = b.astype(jnp.bfloat16).astype(jnp.float32)
            raw.append((w, b))
        self.ref_params = raw                  # unpadded f32, torch-shaped (in, out)

        Sp = _ceil_to(S, 128)
        AEp = _ceil_to(2 * V, 128)
        hp = [Sp] + [_ceil_to(d, 128) for d in dims[1:]]
        Kp = hp[3]                             # layer-4 K (>= hp[4] always)
        self._Sp, self._AEp, self._Hout_p = Sp, AEp, hp[5]

        bf16 = jnp.bfloat16
        (w1, b1), (w2, b2), (w3, b3), (w4, b4), (w5, b5) = raw
        w1s = _pad2(w1[:S, :], Sp, hp[1]).astype(bf16)     # shape-feature K block
        w1a = _pad2(w1[S:, :], AEp, hp[1]).astype(bf16)    # azim/elev K block
        w2p = _pad2(w2, hp[1], hp[2]).astype(bf16)
        w3p = _pad2(w3, hp[2], hp[3]).astype(bf16)
        # Fuse w4 / w5 into a single (Kp, Kp + hp[5]) block (one DMA, one spec);
        # layer-4 output is widened to Kp with zero columns (harmless relu(0)=0).
        w45 = jnp.concatenate(
            [_pad2(w4, Kp, Kp), _pad2(w5, Kp, hp[5])], axis=1).astype(bf16)

        # Pack all five biases into one (8, Wb) block (rows 0..4, zero padded).
        Wb = max(hp[1], hp[2], hp[3], hp[5])
        bias_pack = np.zeros((8, Wb), np.float32)
        for r, (_, b) in enumerate(raw):
            bias_pack[r, :b.shape[1]] = np.asarray(b)[0]
        bias_pack = jnp.asarray(bias_pack).astype(bf16)

        self.kernel_params = (w1s, w1a, w2p, w3p, w45, bias_pack)

    # ---------------------------------------------------------------- forward
    def _random_views(self, key, c_batch_size):
        """torch.rand-based random views (uniform [0,1))."""
        B, V = c_batch_size, self.nb_views
        k_az, k_el, k_d = jax.random.split(key, 3)
        c_azim = (jnp.broadcast_to(self.views_azim, (B, V))
                  + jax.random.uniform(k_az, (B, V), jnp.float32) * 360.0 - 180.0)
        c_elev = (jnp.broadcast_to(self.views_elev, (B, V))
                  + jax.random.uniform(k_el, (B, V), jnp.float32) * 180.0 - 90.0)
        c_dist = jnp.broadcast_to(self.views_dist, (B, V))
        c_dist = c_dist + (float(self.transform_distance) * c_dist
                           * (jax.random.uniform(k_d, (B, V), jnp.float32) - 0.499))
        return c_azim, c_elev, c_dist

    def forward(self, shape_features=None, c_batch_size=1, key=None):
        # Note: with key=None the "random" views repeat across calls (semantic
        # difference from torch.rand's per-call RNG); pass a fresh key for parity.
        if key is None:
            key = jax.random.PRNGKey(0)
        V = self.nb_views
        c_azim, c_elev, c_dist = self._random_views(key, c_batch_size)
        adj = view_transformer_forward(
            shape_features, c_azim, c_elev, self.kernel_params,
            S=self.shape_features_size, V=V,
            Sp=self._Sp, AEp=self._AEp, Hout_p=self._Hout_p)
        # torch.chunk(adj, 2, dim=1) + broadcast-adds: trivial XLA elementwise.
        return (c_azim + adj[:, :V] * (180.0 / V),
                c_elev + adj[:, V:] * 90.0,
                c_dist)

    __call__ = forward


# ----------------------------------------------------------------------------
# Pure-JAX reference (torch-shaped: concat + full W1) at the kernel's precision
# (bf16 weights & activations, f32 accumulation) — verifies the Pallas plumbing
# (split-K, padding, BN/bias fold, tanh, output scaling).
# ----------------------------------------------------------------------------
def _reference_forward(vs, shape_features, c_batch_size, key):
    V = vs.nb_views
    bf16 = jnp.bfloat16
    c_azim, c_elev, c_dist = vs._random_views(key, c_batch_size)
    h = jnp.concatenate([shape_features, c_azim, c_elev], axis=1).astype(bf16)
    for (w, b) in vs.ref_params[:-1]:
        z = jnp.dot(h, w.astype(bf16), preferred_element_type=jnp.float32) + b
        h = jnp.maximum(z, 0.0).astype(bf16)
    w, b = vs.ref_params[-1]
    y = jnp.tanh(jnp.dot(h, w.astype(bf16), preferred_element_type=jnp.float32) + b)
    return (c_azim + y[:, :V] * (180.0 / V),
            c_elev + y[:, V:] * 90.0,
            c_dist)


# ----------------------------------------------------------------------------
if __name__ == "__main__":
    B, V, S = 2, 12, 128      # small test shapes (module default S=512 also works)
    root = jax.random.PRNGKey(0)
    k_init, k_sf, k_fwd = jax.random.split(root, 3)
    shape_features = jax.random.normal(k_sf, (B, S), jnp.float32)

    vs = LearnedRandomViewSelector(nb_views=V, canonical_distance=2.2,
                                   shape_features_size=S,
                                   transform_distance=False, key=k_init)

    a, e, d = vs(shape_features=shape_features, c_batch_size=B, key=k_fwd)
    jax.block_until_ready((a, e, d))

    ra, re, rd = _reference_forward(vs, shape_features, B, k_fwd)
    assert a.shape == (B, V) and e.shape == (B, V) and d.shape == (B, V)
    np.testing.assert_allclose(np.asarray(a), np.asarray(ra), rtol=1e-4, atol=2e-3)
    np.testing.assert_allclose(np.asarray(e), np.asarray(re), rtol=1e-4, atol=2e-3)
    np.testing.assert_allclose(np.asarray(d), np.asarray(rd), rtol=0.0, atol=1e-6)

    print("KERNEL_OK")
</pallas_src>

<mosaic_0001>
module attributes {stable_mosaic.version = 11 : i64} {
  func.func @_view_transformer_kernel(%arg0: i32, %arg1: memref<8x128xbf16, #tpu.memory_space<vmem>>, %arg2: memref<8x128xbf16, #tpu.memory_space<vmem>>, %arg3: memref<128x128xbf16, #tpu.memory_space<vmem>>, %arg4: memref<128x128xbf16, #tpu.memory_space<vmem>>, %arg5: memref<128x128xbf16, #tpu.memory_space<vmem>>, %arg6: memref<128x128xbf16, #tpu.memory_space<vmem>>, %arg7: memref<128x256xbf16, #tpu.memory_space<vmem>>, %arg8: memref<8x128xbf16, #tpu.memory_space<vmem>>, %arg9: memref<8x128xf32, #tpu.memory_space<vmem>>) attributes {dimension_semantics = [#tpu.dimension_semantics<parallel>], iteration_bounds = array<i64: 1>, scalar_prefetch = 0 : i64, scratch_operands = 0 : i64, tpu.core_type = #tpu.core_type<tc>, window_params = [{transform_indices = @transform_0, window_bounds = array<i64: 8, 128>}, {transform_indices = @transform_1, window_bounds = array<i64: 8, 128>}, {pipeline_mode = #tpu.pipeline_mode<synchronous>, transform_indices = @transform_2, window_bounds = array<i64: 128, 128>}, {pipeline_mode = #tpu.pipeline_mode<synchronous>, transform_indices = @transform_3, window_bounds = array<i64: 128, 128>}, {pipeline_mode = #tpu.pipeline_mode<synchronous>, transform_indices = @transform_4, window_bounds = array<i64: 128, 128>}, {pipeline_mode = #tpu.pipeline_mode<synchronous>, transform_indices = @transform_5, window_bounds = array<i64: 128, 128>}, {pipeline_mode = #tpu.pipeline_mode<synchronous>, transform_indices = @transform_6, window_bounds = array<i64: 128, 256>}, {pipeline_mode = #tpu.pipeline_mode<synchronous>, transform_indices = @transform_7, window_bounds = array<i64: 8, 128>}, {transform_indices = @transform_8, window_bounds = array<i64: 8, 128>}]} {
    %c0 = arith.constant 0 : index
    %c0_0 = arith.constant 0 : index
    %0 = vector.load %arg8[%c0, %c0_0] : memref<8x128xbf16, #tpu.memory_space<vmem>>, vector<8x128xbf16>
    %1 = arith.extf %0 : vector<8x128xbf16> to vector<8x128xf32>
    %2 = vector.extract_strided_slice %1 {offsets = [0, 0], sizes = [1, 128], strides = [1, 1]} : vector<8x128xf32> to vector<1x128xf32>
    %3 = vector.extract_strided_slice %1 {offsets = [1, 0], sizes = [1, 128], strides = [1, 1]} : vector<8x128xf32> to vector<1x128xf32>
    %4 = vector.extract_strided_slice %1 {offsets = [2, 0], sizes = [1, 128], strides = [1, 1]} : vector<8x128xf32> to vector<1x128xf32>
    %5 = vector.extract_strided_slice %1 {offsets = [3, 0], sizes = [1, 128], strides = [1, 1]} : vector<8x128xf32> to vector<1x128xf32>
    %6 = vector.extract_strided_slice %1 {offsets = [4, 0], sizes = [1, 128], strides = [1, 1]} : vector<8x128xf32> to vector<1x128xf32>
    %c0_1 = arith.constant 0 : index
    %c0_2 = arith.constant 0 : index
    %7 = vector.load %arg7[%c0_1, %c0_2] : memref<128x256xbf16, #tpu.memory_space<vmem>>, vector<128x256xbf16>
    %8 = vector.extract_strided_slice %7 {offsets = [0, 0], sizes = [128, 128], strides = [1, 1]} : vector<128x256xbf16> to vector<128x128xbf16>
    %9 = vector.extract_strided_slice %7 {offsets = [0, 128], sizes = [128, 128], strides = [1, 1]} : vector<128x256xbf16> to vector<128x128xbf16>
    %c0_3 = arith.constant 0 : index
    %c0_4 = arith.constant 0 : index
    %10 = vector.load %arg1[%c0_3, %c0_4] : memref<8x128xbf16, #tpu.memory_space<vmem>>, vector<8x128xbf16>
    %c0_5 = arith.constant 0 : index
    %c0_6 = arith.constant 0 : index
    %11 = vector.load %arg3[%c0_5, %c0_6] : memref<128x128xbf16, #tpu.memory_space<vmem>>, vector<128x128xbf16>
    %cst = arith.constant dense<0.000000e+00> : vector<8x128xf32>
    %12 = tpu.matmul %10, %11, %cst {dimension_numbers = #tpu.dot_dimension_numbers<[1], [0], [0], [1], [0, 0, 1, 1], [], []>} : vector<8x128xbf16>, vector<128x128xbf16>, vector<8x128xf32> -> vector<8x128xf32>
    %c0_7 = arith.constant 0 : index
    %c0_8 = arith.constant 0 : index
    %13 = vector.load %arg2[%c0_7, %c0_8] : memref<8x128xbf16, #tpu.memory_space<vmem>>, vector<8x128xbf16>
    %c0_9 = arith.constant 0 : index
    %c0_10 = arith.constant 0 : index
    %14 = vector.load %arg4[%c0_9, %c0_10] : memref<128x128xbf16, #tpu.memory_space<vmem>>, vector<128x128xbf16>
    %cst_11 = arith.constant dense<0.000000e+00> : vector<8x128xf32>
    %15 = tpu.matmul %13, %14, %cst_11 {dimension_numbers = #tpu.dot_dimension_numbers<[1], [0], [0], [1], [0, 0, 1, 1], [], []>} : vector<8x128xbf16>, vector<128x128xbf16>, vector<8x128xf32> -> vector<8x128xf32>
    %16 = arith.addf %12, %15 : vector<8x128xf32>
    %17 = vector.broadcast %2 : vector<1x128xf32> to vector<8x128xf32>
    %18 = arith.addf %16, %17 : vector<8x128xf32>
    %cst_12 = arith.constant 0.000000e+00 : f32
    %19 = vector.broadcast %cst_12 : f32 to vector<8x128xf32>
    %20 = arith.maximumf %18, %19 : vector<8x128xf32>
    %21 = arith.truncf %20 : vector<8x128xf32> to vector<8x128xbf16>
    %c0_13 = arith.constant 0 : index
    %c0_14 = arith.constant 0 : index
    %22 = vector.load %arg5[%c0_13, %c0_14] : memref<128x128xbf16, #tpu.memory_space<vmem>>, vector<128x128xbf16>
    %cst_15 = arith.constant dense<0.000000e+00> : vector<8x128xf32>
    %23 = tpu.matmul %21, %22, %cst_15 {dimension_numbers = #tpu.dot_dimension_numbers<[1], [0], [0], [1], [0, 0, 1, 1], [], []>} : vector<8x128xbf16>, vector<128x128xbf16>, vector<8x128xf32> -> vector<8x128xf32>
    %24 = vector.broadcast %3 : vector<1x128xf32> to vector<8x128xf32>
    %25 = arith.addf %23, %24 : vector<8x128xf32>
    %cst_16 = arith.constant 0.000000e+00 : f32
    %26 = vector.broadcast %cst_16 : f32 to vector<8x128xf32>
    %27 = arith.maximumf %25, %26 : vector<8x128xf32>
    %28 = arith.truncf %27 : vector<8x128xf32> to vector<8x128xbf16>
    %c0_17 = arith.constant 0 : index
    %c0_18 = arith.constant 0 : index
    %29 = vector.load %arg6[%c0_17, %c0_18] : memref<128x128xbf16, #tpu.memory_space<vmem>>, vector<128x128xbf16>
    %cst_19 = arith.constant dense<0.000000e+00> : vector<8x128xf32>
    %30 = tpu.matmul %28, %29, %cst_19 {dimension_numbers = #tpu.dot_dimension_numbers<[1], [0], [0], [1], [0, 0, 1, 1], [], []>} : vector<8x128xbf16>, vector<128x128xbf16>, vector<8x128xf32> -> vector<8x128xf32>
    %31 = vector.broadcast %4 : vector<1x128xf32> to vector<8x128xf32>
    %32 = arith.addf %30, %31 : vector<8x128xf32>
    %cst_20 = arith.constant 0.000000e+00 : f32
    %33 = vector.broadcast %cst_20 : f32 to vector<8x128xf32>
    %34 = arith.maximumf %32, %33 : vector<8x128xf32>
    %35 = arith.truncf %34 : vector<8x128xf32> to vector<8x128xbf16>
    %cst_21 = arith.constant dense<0.000000e+00> : vector<8x128xf32>
    %36 = tpu.matmul %35, %8, %cst_21 {dimension_numbers = #tpu.dot_dimension_numbers<[1], [0], [0], [1], [0, 0, 1, 1], [], []>} : vector<8x128xbf16>, vector<128x128xbf16>, vector<8x128xf32> -> vector<8x128xf32>
    %37 = vector.broadcast %5 : vector<1x128xf32> to vector<8x128xf32>
    %38 = arith.addf %36, %37 : vector<8x128xf32>
    %cst_22 = arith.constant 0.000000e+00 : f32
    %39 = vector.broadcast %cst_22 : f32 to vector<8x128xf32>
    %40 = arith.maximumf %38, %39 : vector<8x128xf32>
    %41 = arith.truncf %40 : vector<8x128xf32> to vector<8x128xbf16>
    %cst_23 = arith.constant dense<0.000000e+00> : vector<8x128xf32>
    %42 = tpu.matmul %41, %9, %cst_23 {dimension_numbers = #tpu.dot_dimension_numbers<[1], [0], [0], [1], [0, 0, 1, 1], [], []>} : vector<8x128xbf16>, vector<128x128xbf16>, vector<8x128xf32> -> vector<8x128xf32>
    %43 = vector.broadcast %6 : vector<1x128xf32> to vector<8x128xf32>
    %44 = arith.addf %42, %43 : vector<8x128xf32>
    %45 = math.tanh %44 : vector<8x128xf32>
    %c0_24 = arith.constant 0 : index
    %c0_25 = arith.constant 0 : index
    %46 = vector.load %arg9[%c0_24, %c0_25] : memref<8x128xf32, #tpu.memory_space<vmem>>, vector<8x128xf32>
    tpu.vector_store %arg9[%c0_24, %c0_25], %45 {strides = array<i32>} : memref<8x128xf32, #tpu.memory_space<vmem>>, vector<8x128xf32>,
    return
  }
  func.func @transform_0(%arg0: i32) -> (i32, i32) {
    %c0_i32 = arith.constant 0 : i32
    %c0_i32_0 = arith.constant 0 : i32
    return %arg0, %c0_i32 : i32, i32
  }
  func.func @transform_1(%arg0: i32) -> (i32, i32) {
    %c0_i32 = arith.constant 0 : i32
    %c0_i32_0 = arith.constant 0 : i32
    return %arg0, %c0_i32 : i32, i32
  }
  func.func @transform_2(%arg0: i32) -> (i32, i32) {
    %c0_i32 = arith.constant 0 : i32
    %c0_i32_0 = arith.constant 0 : i32
    %c0_i32_1 = arith.constant 0 : i32
    return %c0_i32, %c0_i32_0 : i32, i32
  }
  func.func @transform_3(%arg0: i32) -> (i32, i32) {
    %c0_i32 = arith.constant 0 : i32
    %c0_i32_0 = arith.constant 0 : i32
    %c0_i32_1 = arith.constant 0 : i32
    return %c0_i32, %c0_i32_0 : i32, i32
  }
  func.func @transform_4(%arg0: i32) -> (i32, i32) {
    %c0_i32 = arith.constant 0 : i32
    %c0_i32_0 = arith.constant 0 : i32
    %c0_i32_1 = arith.constant 0 : i32
    return %c0_i32, %c0_i32_0 : i32, i32
  }
  func.func @transform_5(%arg0: i32) -> (i32, i32) {
    %c0_i32 = arith.constant 0 : i32
    %c0_i32_0 = arith.constant 0 : i32
    %c0_i32_1 = arith.constant 0 : i32
    return %c0_i32, %c0_i32_0 : i32, i32
  }
  func.func @transform_6(%arg0: i32) -> (i32, i32) {
    %c0_i32 = arith.constant 0 : i32
    %c0_i32_0 = arith.constant 0 : i32
    %c0_i32_1 = arith.constant 0 : i32
    return %c0_i32, %c0_i32_0 : i32, i32
  }
  func.func @transform_7(%arg0: i32) -> (i32, i32) {
    %c0_i32 = arith.constant 0 : i32
    %c0_i32_0 = arith.constant 0 : i32
    %c0_i32_1 = arith.constant 0 : i32
    return %c0_i32, %c0_i32_0 : i32, i32
  }
  func.func @transform_8(%arg0: i32) -> (i32, i32) {
    %c0_i32 = arith.constant 0 : i32
    %c0_i32_0 = arith.constant 0 : i32
    return %arg0, %c0_i32 : i32, i32
  }
}

</mosaic_0001>

<llo_original>
// kernel: tpu_custom_call.1
$region0: #{tpu_custom_call.1}
  #allocation0 [shape = 'u32[]', space=smem, size = 0x4, offset = 0x4, fixed_abs, tag = 'smem constant byte address 0x4 - core index']
  #allocation1 [shape = 'u32[144,128]{1,0:T(1,128)}', space=vmem, size = 0x12000, scoped, tag = 'internal scratch']
  %s0 = inlined_call_operand.hbm [shape: bf16[8,128], index: 0, kind: input, shape index: {}]
  %s1 = inlined_call_operand.hbm [shape: bf16[8,128], index: 1, kind: input, shape index: {}]
  %s2 = inlined_call_operand.hbm [shape: bf16[128,128], index: 2, kind: input, shape index: {}]
  %s3 = inlined_call_operand.hbm [shape: bf16[128,128], index: 3, kind: input, shape index: {}]
  %s4 = inlined_call_operand.hbm [shape: bf16[128,128], index: 4, kind: input, shape index: {}]
  %s5 = inlined_call_operand.hbm [shape: bf16[128,128], index: 5, kind: input, shape index: {}]
  %s6 = inlined_call_operand.hbm [shape: bf16[128,256], index: 6, kind: input, shape index: {}]
  %s7 = inlined_call_operand.vmem [shape: bf16[8,128], index: 7, kind: input, shape index: {}]
  %s8 = inlined_call_operand.hbm [shape: f32[8,128], index: 8, kind: output, shape index: {}]
  %s9 = sld [smem:[#allocation0]]
  $region70: #{tpu_custom_call.1} parent=0
    _
  %s11 = ssub.s32 1, %s9
  %s12 = scalar_select 0, %s11, %s9
  $region1: #{tpu_custom_call.1} parent=0
    #allocation2 [shape = 'u8[2048]{0}', space=vmem, size = 0x800, scoped, tag = 'input window, operand 0, single buffered']
    #allocation3 [shape = 's32[1]{0}', space=sflag, size = 0x4, scoped, tag = 'scoped memory for tpu_custom_call.1']
    #allocation4 [shape = 's32[1]{0}', space=sflag, size = 0x4, scoped, tag = 'scoped memory for tpu_custom_call.1']
    #allocation5 [shape = 'u8[2048]{0}', space=vmem, size = 0x800, scoped, tag = 'input window, operand 1, single buffered']
    #allocation6 [shape = 's32[1]{0}', space=sflag, size = 0x4, scoped, tag = 'scoped memory for tpu_custom_call.1']
    #allocation7 [shape = 'u8[32768]{0}', space=vmem, size = 0x8000, scoped, tag = 'input window, operand 2, single buffered']
    #allocation8 [shape = 'u8[32768]{0}', space=vmem, size = 0x8000, scoped, tag = 'input window, operand 3, single buffered']
    #allocation9 [shape = 's32[1]{0}', space=sflag, size = 0x4, scoped, tag = 'scoped memory for tpu_custom_call.1']
    #allocation10 [shape = 'u8[32768]{0}', space=vmem, size = 0x8000, scoped, tag = 'input window, operand 4, single buffered']
    #allocation11 [shape = 'u8[32768]{0}', space=vmem, size = 0x8000, scoped, tag = 'input window, operand 5, single buffered']
    #allocation12 [shape = 's32[1]{0}', space=sflag, size = 0x4, scoped, tag = 'scoped memory for tpu_custom_call.1']
    #allocation13 [shape = 'u8[65536]{0}', space=vmem, size = 0x10000, scoped, tag = 'input window, operand 6, single buffered']
    #allocation14 [shape = 'u8[4096]{0}', space=vmem, size = 0x1000, scoped, tag = 'output window, operand 0, single buffered']
    %13 = vsyncpa [#allocation3], 0
    %14 = vsyncpa [#allocation6], 0
    %15 = vsyncpa [#allocation9], 0
    %16 = vsyncpa [#allocation12], 0
    %17 = vsyncpa [#allocation4], 0
    // Predicated region
    $region2: #{tpu_custom_call.1} parent=1 // pred_check
      _
    $region3: #{tpu_custom_call.1} parent=1 // pred_check_branch
      %19 = sbr.rel (0) target = $region5
    $region4: #{tpu_custom_call.1} parent=1 // pred_region
      %s21 = ssub.s32 64, 64
      %22 = vsyncadd [#allocation3], %s21
      %s24 = sshll.u32 [#allocation2], 4
      %s25 = int_to_ptr.vmem [resolvable:$true] %s24
      %27 = dma.hbm_to_vmem [thread:$0]  %s0, 64, %s25, [#allocation3]
    $region5: #{tpu_custom_call.1} parent=1 // pred_fallthru
      _
    // Predicated region
    $region6: #{tpu_custom_call.1} parent=1 // pred_check
      _
    $region7: #{tpu_custom_call.1} parent=1 // pred_check_branch
      %29 = sbr.rel (0) target = $region9
    $region8: #{tpu_custom_call.1} parent=1 // pred_region
      %s31 = ssub.s32 64, 64
      %32 = vsyncadd [#allocation6], %s31
      %s34 = sshll.u32 [#allocation5], 4
      %s35 = int_to_ptr.vmem [resolvable:$true] %s34
      %37 = dma.hbm_to_vmem [thread:$0]  %s1, 64, %s35, [#allocation6]
    $region9: #{tpu_custom_call.1} parent=1 // pred_fallthru
      _
    // Predicated region
    $region10: #{tpu_custom_call.1} parent=1 // pred_check
      _
    $region11: #{tpu_custom_call.1} parent=1 // pred_check_branch
      %39 = sbr.rel (0) target = $region13
    $region12: #{tpu_custom_call.1} parent=1 // pred_region
      %s41 = ssub.s32 1024, 1024
      %42 = vsyncadd [#allocation6], %s41
      %s43 = sshll.u32 [#allocation7], 4
      %s44 = int_to_ptr.vmem [resolvable:$true] %s43
      %49 = dma.hbm_to_vmem [thread:$0]  %s2, 1024, %s44, [#allocation6], 64, 64, 4
    $region13: #{tpu_custom_call.1} parent=1 // pred_fallthru
      _
    // Predicated region
    $region14: #{tpu_custom_call.1} parent=1 // pred_check
      _
    $region15: #{tpu_custom_call.1} parent=1 // pred_check_branch
      %51 = sbr.rel (0) target = $region17
    $region16: #{tpu_custom_call.1} parent=1 // pred_region
      %s53 = ssub.s32 1024, 1024
      %54 = vsyncadd [#allocation9], %s53
      %s55 = sshll.u32 [#allocation8], 4
      %s56 = int_to_ptr.vmem [resolvable:$true] %s55
      %61 = dma.hbm_to_vmem [thread:$0]  %s3, 1024, %s56, [#allocation9], 64, 64, 4
    $region17: #{tpu_custom_call.1} parent=1 // pred_fallthru
      _
    // Predicated region
    $region18: #{tpu_custom_call.1} parent=1 // pred_check
      _
    $region19: #{tpu_custom_call.1} parent=1 // pred_check_branch
      %63 = sbr.rel (0) target = $region21
    $region20: #{tpu_custom_call.1} parent=1 // pred_region
      %s65 = ssub.s32 1024, 1024
      %66 = vsyncadd [#allocation9], %s65
      %s67 = sshll.u32 [#allocation10], 4
      %s68 = int_to_ptr.vmem [resolvable:$true] %s67
      %73 = dma.hbm_to_vmem [thread:$0]  %s4, 1024, %s68, [#allocation9], 64, 64, 4
    $region21: #{tpu_custom_call.1} parent=1 // pred_fallthru
      _
    // Predicated region
    $region22: #{tpu_custom_call.1} parent=1 // pred_check
      _
    $region23: #{tpu_custom_call.1} parent=1 // pred_check_branch
      %75 = sbr.rel (0) target = $region25
    $region24: #{tpu_custom_call.1} parent=1 // pred_region
      %s77 = ssub.s32 1024, 1024
      %78 = vsyncadd [#allocation12], %s77
      %s79 = sshll.u32 [#allocation11], 4
      %s80 = int_to_ptr.vmem [resolvable:$true] %s79
      %85 = dma.hbm_to_vmem [thread:$0]  %s5, 1024, %s80, [#allocation12], 64, 64, 4
    $region25: #{tpu_custom_call.1} parent=1 // pred_fallthru
      _
    // Predicated region
    $region26: #{tpu_custom_call.1} parent=1 // pred_check
      _
    $region27: #{tpu_custom_call.1} parent=1 // pred_check_branch
      %87 = sbr.rel (0) target = $region29
    $region28: #{tpu_custom_call.1} parent=1 // pred_region
      %s89 = ssub.s32 2048, 2048
      %90 = vsyncadd [#allocation12], %s89
      %s91 = sshll.u32 [#allocation13], 4
      %s92 = int_to_ptr.vmem [resolvable:$true] %s91
      %97 = dma.hbm_to_vmem [thread:$0]  %s6, 2048, %s92, [#allocation12], 128, 128, 8
    $region29: #{tpu_custom_call.1} parent=1 // pred_fallthru
      _
    // Predicated region
    $region30: #{tpu_custom_call.1} parent=1 // pred_check
      _
    $region31: #{tpu_custom_call.1} parent=1 // pred_check_branch
      %99 = sbr.rel (0) target = $region33
    $region32: #{tpu_custom_call.1} parent=1 // pred_region
      _
    $region33: #{tpu_custom_call.1} parent=1 // pred_fallthru
      _
    // Predicated region
    $region34: #{tpu_custom_call.1} parent=1 // pred_check
      _
    $region35: #{tpu_custom_call.1} parent=1 // pred_check_branch
      %101 = sbr.rel (0) target = $region37
    $region36: #{tpu_custom_call.1} parent=1 // pred_region
      %102 = dma.done [#allocation3], 64
    $region37: #{tpu_custom_call.1} parent=1 // pred_fallthru
      _
    // Predicated region
    $region38: #{tpu_custom_call.1} parent=1 // pred_check
      _
    $region39: #{tpu_custom_call.1} parent=1 // pred_check_branch
      %104 = sbr.rel (0) target = $region41
    $region40: #{tpu_custom_call.1} parent=1 // pred_region
      %105 = dma.done [#allocation6], 64
    $region41: #{tpu_custom_call.1} parent=1 // pred_fallthru
      _
    // Predicated region
    $region42: #{tpu_custom_call.1} parent=1 // pred_check
      _
    $region43: #{tpu_custom_call.1} parent=1 // pred_check_branch
      %107 = sbr.rel (0) target = $region45
    $region44: #{tpu_custom_call.1} parent=1 // pred_region
      %108 = dma.done [#allocation6], 1024
    $region45: #{tpu_custom_call.1} parent=1 // pred_fallthru
      _
    // Predicated region
    $region46: #{tpu_custom_call.1} parent=1 // pred_check
      _
    $region47: #{tpu_custom_call.1} parent=1 // pred_check_branch
      %110 = sbr.rel (0) target = $region49
    $region48: #{tpu_custom_call.1} parent=1 // pred_region
      %111 = dma.done [#allocation9], 1024
    $region49: #{tpu_custom_call.1} parent=1 // pred_fallthru
      _
    // Predicated region
    $region50: #{tpu_custom_call.1} parent=1 // pred_check
      _
    $region51: #{tpu_custom_call.1} parent=1 // pred_check_branch
      %113 = sbr.rel (0) target = $region53
    $region52: #{tpu_custom_call.1} parent=1 // pred_region
      %114 = dma.done [#allocation9], 1024
    $region53: #{tpu_custom_call.1} parent=1 // pred_fallthru
      _
    // Predicated region
    $region54: #{tpu_custom_call.1} parent=1 // pred_check
      _
    $region55: #{tpu_custom_call.1} parent=1 // pred_check_branch
      %116 = sbr.rel (0) target = $region57
    $region56: #{tpu_custom_call.1} parent=1 // pred_region
      %117 = dma.done [#allocation12], 1024
    $region57: #{tpu_custom_call.1} parent=1 // pred_fallthru
      _
    // Predicated region
    $region58: #{tpu_custom_call.1} parent=1 // pred_check
      _
    $region59: #{tpu_custom_call.1} parent=1 // pred_check_branch
      %119 = sbr.rel (0) target = $region61
    $region60: #{tpu_custom_call.1} parent=1 // pred_region
      %120 = dma.done [#allocation12], 2048
    $region61: #{tpu_custom_call.1} parent=1 // pred_fallthru
      _
    %v122 = vld [vmem:[%s7] sm:$0xf]
    %v123 = vunpack.c.l.bf16 %v122
    %v124 = vld [vmem:[#allocation13] sm:$0xff]
    %v125 = vld [vmem:[#allocation13 + $0x8] sm:$0xff]
    %v126 = vld [vmem:[#allocation13 + $0x10] sm:$0xff]
    %v127 = vld [vmem:[#allocation13 + $0x18] sm:$0xff]
    %v128 = vld [vmem:[#allocation13 + $0x20] sm:$0xff]
    %v129 = vld [vmem:[#allocation13 + $0x28] sm:$0xff]
    %v130 = vld [vmem:[#allocation13 + $0x30] sm:$0xff]
    %v131 = vld [vmem:[#allocation13 + $0x38] sm:$0xff]
    %v132 = vld [vmem:[#allocation13 + $0x40] sm:$0xff]
    %v133 = vld [vmem:[#allocation13 + $0x48] sm:$0xff]
    %v134 = vld [vmem:[#allocation13 + $0x50] sm:$0xff]
    %v135 = vld [vmem:[#allocation13 + $0x58] sm:$0xff]
    %v136 = vld [vmem:[#allocation13 + $0x60] sm:$0xff]
    %v137 = vld [vmem:[#allocation13 + $0x68] sm:$0xff]
    %v138 = vld [vmem:[#allocation13 + $0x70] sm:$0xff]
    %v139 = vld [vmem:[#allocation13 + $0x78] sm:$0xff]
    %v140 = vld [vmem:[#allocation2] sm:$0xf]
    %v141 = vld [vmem:[#allocation7] sm:$0xf]
    %v142 = vld [vmem:[#allocation7 + $0x4] sm:$0xf]
    %v143 = vld [vmem:[#allocation7 + $0x8] sm:$0xf]
    %v144 = vld [vmem:[#allocation7 + $0xc] sm:$0xf]
    %v145 = vld [vmem:[#allocation7 + $0x10] sm:$0xf]
    %v146 = vld [vmem:[#allocation7 + $0x14] sm:$0xf]
    %v147 = vld [vmem:[#allocation7 + $0x18] sm:$0xf]
    %v148 = vld [vmem:[#allocation7 + $0x1c] sm:$0xf]
    %v149 = vld [vmem:[#allocation7 + $0x20] sm:$0xf]
    %v150 = vld [vmem:[#allocation7 + $0x24] sm:$0xf]
    %v151 = vld [vmem:[#allocation7 + $0x28] sm:$0xf]
    %v152 = vld [vmem:[#allocation7 + $0x2c] sm:$0xf]
    %v153 = vld [vmem:[#allocation7 + $0x30] sm:$0xf]
    %v154 = vld [vmem:[#allocation7 + $0x34] sm:$0xf]
    %v155 = vld [vmem:[#allocation7 + $0x38] sm:$0xf]
    %v156 = vld [vmem:[#allocation7 + $0x3c] sm:$0xf]
    %v157 = vld [vmem:[#allocation5] sm:$0xf]
    %v158 = vld [vmem:[#allocation8] sm:$0xf]
    %v159 = vld [vmem:[#allocation8 + $0x4] sm:$0xf]
    %v160 = vld [vmem:[#allocation8 + $0x8] sm:$0xf]
    %v161 = vld [vmem:[#allocation8 + $0xc] sm:$0xf]
    %v162 = vld [vmem:[#allocation8 + $0x10] sm:$0xf]
    %v163 = vld [vmem:[#allocation8 + $0x14] sm:$0xf]
    %v164 = vld [vmem:[#allocation8 + $0x18] sm:$0xf]
    %v165 = vld [vmem:[#allocation8 + $0x1c] sm:$0xf]
    %v166 = vld [vmem:[#allocation8 + $0x20] sm:$0xf]
    %v167 = vld [vmem:[#allocation8 + $0x24] sm:$0xf]
    %v168 = vld [vmem:[#allocation8 + $0x28] sm:$0xf]
    %v169 = vld [vmem:[#allocation8 + $0x2c] sm:$0xf]
    %v170 = vld [vmem:[#allocation8 + $0x30] sm:$0xf]
    %v171 = vld [vmem:[#allocation8 + $0x34] sm:$0xf]
    %v172 = vld [vmem:[#allocation8 + $0x38] sm:$0xf]
    %v173 = vld [vmem:[#allocation8 + $0x3c] sm:$0xf]
    %v190 = vunpack.c.l.b16 %v158
    %v191 = vunpack.c.l.b16 %v159
    %v192 = vunpack.c.l.b16 %v160
    %v193 = vunpack.c.l.b16 %v161
    %v194 = vunpack.c.l.b16 %v162
    %v195 = vunpack.c.l.b16 %v163
    %v196 = vunpack.c.l.b16 %v164
    %v197 = vunpack.c.l.b16 %v165
    %v198 = vunpack.c.l.b16 %v166
    %v199 = vunpack.c.l.b16 %v167
    %v200 = vunpack.c.l.b16 %v168
    %v201 = vunpack.c.l.b16 %v169
    %v202 = vunpack.c.l.b16 %v170
    %v203 = vunpack.c.l.b16 %v171
    %v204 = vunpack.c.l.b16 %v172
    %v205 = vunpack.c.l.b16 %v173
    %v206 = vpack.c.b16 %v191, %v190
    %v207 = vpack.c.b16 %v193, %v192
    %v208 = vpack.c.b16 %v195, %v194
    %v209 = vpack.c.b16 %v197, %v196
    %v210 = vpack.c.b16 %v199, %v198
    %v211 = vpack.c.b16 %v201, %v200
    %v212 = vpack.c.b16 %v203, %v202
    %v213 = vpack.c.b16 %v205, %v204
    %222 = vmatprep.subr.bf16.mxu0 0
    %223 = vmatpush1.bf16.msra.mxu0 %v213
    %224 = vmatprep.subr.bf16.mxu0 0
    %225 = vmatpush1.bf16.msra.mxu0 %v212
    %226 = vmatprep.subr.bf16.mxu0 0
    %227 = vmatpush1.bf16.msra.mxu0 %v211
    %228 = vmatprep.subr.bf16.mxu0 0
    %229 = vmatpush1.bf16.msra.mxu0 %v210
    %230 = vmatprep.subr.bf16.mxu0 0
    %231 = vmatpush1.bf16.msra.mxu0 %v209
    %232 = vmatprep.subr.bf16.mxu0 0
    %233 = vmatpush1.bf16.msra.mxu0 %v208
    %234 = vmatprep.subr.bf16.mxu0 0
    %235 = vmatpush1.bf16.msra.mxu0 %v207
    %236 = vmatprep.subr.bf16.mxu0 0
    %237 = vmatpush1.bf16.msra.mxu0 %v206
    %238 = vmatprep.subr.bf16.mxu0 0
    %239 = vmatpush2.bf16.msra.mxu0 0
    %240 = vmatprep.subr.bf16.mxu0 0
    %241 = vmatpush2.bf16.msra.mxu0 0
    %242 = vmatprep.subr.bf16.mxu0 0
    %243 = vmatpush2.bf16.msra.mxu0 0
    %244 = vmatprep.subr.bf16.mxu0 0
    %245 = vmatpush2.bf16.msra.mxu0 0
    %246 = vmatprep.subr.bf16.mxu0 0
    %247 = vmatpush2.bf16.msra.mxu0 0
    %248 = vmatprep.subr.bf16.mxu0 0
    %249 = vmatpush2.bf16.msra.mxu0 0
    %250 = vmatprep.subr.bf16.mxu0 0
    %251 = vmatpush2.bf16.msra.mxu0 0
    %252 = vmatprep.subr.bf16.mxu0 0
    %253 = vmatpush2.bf16.msra.mxu0 0
    %254 = vmatprep.mubr.bf16.mxu0 0
    %255 = vmatmul.mubr.bf16.gmra.mxu0 %v157
    %v256 = vpop.f32.mrf.mxu0
    %v257 = vadd.f32 0.0, %v256
    %v258 = vpop.f32.mrf.mxu0
    %v259 = vpop.f32.mrf.mxu0
    %v260 = vpop.f32.mrf.mxu0
    %261 = vdwg.mxu0
    %v278 = vunpack.c.l.b16 %v141
    %v279 = vunpack.c.l.b16 %v142
    %v280 = vunpack.c.l.b16 %v143
    %v281 = vunpack.c.l.b16 %v144
    %v282 = vunpack.c.l.b16 %v145
    %v283 = vunpack.c.l.b16 %v146
    %v284 = vunpack.c.l.b16 %v147
    %v285 = vunpack.c.l.b16 %v148
    %v286 = vunpack.c.l.b16 %v149
    %v287 = vunpack.c.l.b16 %v150
    %v288 = vunpack.c.l.b16 %v151
    %v289 = vunpack.c.l.b16 %v152
    %v290 = vunpack.c.l.b16 %v153
    %v291 = vunpack.c.l.b16 %v154
    %v292 = vunpack.c.l.b16 %v155
    %v293 = vunpack.c.l.b16 %v156
    %v294 = vpack.c.b16 %v279, %v278
    %v295 = vpack.c.b16 %v281, %v280
    %v296 = vpack.c.b16 %v283, %v282
    %v297 = vpack.c.b16 %v285, %v284
    %v298 = vpack.c.b16 %v287, %v286
    %v299 = vpack.c.b16 %v289, %v288
    %v300 = vpack.c.b16 %v291, %v290
    %v301 = vpack.c.b16 %v293, %v292
    %310 = vmatprep.subr.bf16.mxu0 0
    %311 = vmatpush1.bf16.msra.mxu0 %v301
    %312 = vmatprep.subr.bf16.mxu0 0
    %313 = vmatpush1.bf16.msra.mxu0 %v300
    %314 = vmatprep.subr.bf16.mxu0 0
    %315 = vmatpush1.bf16.msra.mxu0 %v299
    %316 = vmatprep.subr.bf16.mxu0 0
    %317 = vmatpush1.bf16.msra.mxu0 %v298
    %318 = vmatprep.subr.bf16.mxu0 0
    %319 = vmatpush1.bf16.msra.mxu0 %v297
    %320 = vmatprep.subr.bf16.mxu0 0
    %321 = vmatpush1.bf16.msra.mxu0 %v296
    %322 = vmatprep.subr.bf16.mxu0 0
    %323 = vmatpush1.bf16.msra.mxu0 %v295
    %324 = vmatprep.subr.bf16.mxu0 0
    %325 = vmatpush1.bf16.msra.mxu0 %v294
    %326 = vmatprep.subr.bf16.mxu0 0
    %327 = vmatpush2.bf16.msra.mxu0 0
    %328 = vmatprep.subr.bf16.mxu0 0
    %329 = vmatpush2.bf16.msra.mxu0 0
    %330 = vmatprep.subr.bf16.mxu0 0
    %331 = vmatpush2.bf16.msra.mxu0 0
    %332 = vmatprep.subr.bf16.mxu0 0
    %333 = vmatpush2.bf16.msra.mxu0 0
    %334 = vmatprep.subr.bf16.mxu0 0
    %335 = vmatpush2.bf16.msra.mxu0 0
    %336 = vmatprep.subr.bf16.mxu0 0
    %337 = vmatpush2.bf16.msra.mxu0 0
    %338 = vmatprep.subr.bf16.mxu0 0
    %339 = vmatpush2.bf16.msra.mxu0 0
    %340 = vmatprep.subr.bf16.mxu0 0
    %341 = vmatpush2.bf16.msra.mxu0 0
    %342 = vmatprep.mubr.bf16.mxu0 0
    %343 = vmatmul.mubr.bf16.gmra.mxu0 %v140
    %v344 = vpop.f32.mrf.mxu0
    %v345 = vadd.f32 %v257, %v344
    %v346 = vpop.f32.mrf.mxu0
    %v347 = vpop.f32.mrf.mxu0
    %v348 = vpop.f32.mrf.mxu0
    %349 = vdwg.mxu0
    %v350 = vlaneseq
    %v351 = vshrl.u32 %v350, 7
    %v352 = vsub.s32 0, %v351
    %v353 = vrot.slane %v123, %v352
    %v354 = vadd.f32 %v345, %v353
    %v355 = vmax.f32 %v354, 0.0
    %v356 = vpack.c.bf16 %v355, %v355
    %v357 = vld [vmem:[#allocation10] sm:$0xf]
    %v358 = vld [vmem:[#allocation10 + $0x4] sm:$0xf]
    %v359 = vld [vmem:[#allocation10 + $0x8] sm:$0xf]
    %v360 = vld [vmem:[#allocation10 + $0xc] sm:$0xf]
    %v361 = vld [vmem:[#allocation10 + $0x10] sm:$0xf]
    %v362 = vld [vmem:[#allocation10 + $0x14] sm:$0xf]
    %v363 = vld [vmem:[#allocation10 + $0x18] sm:$0xf]
    %v364 = vld [vmem:[#allocation10 + $0x1c] sm:$0xf]
    %v365 = vld [vmem:[#allocation10 + $0x20] sm:$0xf]
    %v366 = vld [vmem:[#allocation10 + $0x24] sm:$0xf]
    %v367 = vld [vmem:[#allocation10 + $0x28] sm:$0xf]
    %v368 = vld [vmem:[#allocation10 + $0x2c] sm:$0xf]
    %v369 = vld [vmem:[#allocation10 + $0x30] sm:$0xf]
    %v370 = vld [vmem:[#allocation10 + $0x34] sm:$0xf]
    %v371 = vld [vmem:[#allocation10 + $0x38] sm:$0xf]
    %v372 = vld [vmem:[#allocation10 + $0x3c] sm:$0xf]
    %v373 = vlaneseq
    %v374 = vshrl.u32 %v373, 7
    %v375 = vsub.s32 1, %v374
    %v376 = vrot.slane %v123, %v375
    %v393 = vunpack.c.l.b16 %v357
    %v394 = vunpack.c.l.b16 %v358
    %v395 = vunpack.c.l.b16 %v359
    %v396 = vunpack.c.l.b16 %v360
    %v397 = vunpack.c.l.b16 %v361
    %v398 = vunpack.c.l.b16 %v362
    %v399 = vunpack.c.l.b16 %v363
    %v400 = vunpack.c.l.b16 %v364
    %v401 = vunpack.c.l.b16 %v365
    %v402 = vunpack.c.l.b16 %v366
    %v403 = vunpack.c.l.b16 %v367
    %v404 = vunpack.c.l.b16 %v368
    %v405 = vunpack.c.l.b16 %v369
    %v406 = vunpack.c.l.b16 %v370
    %v407 = vunpack.c.l.b16 %v371
    %v408 = vunpack.c.l.b16 %v372
    %v409 = vpack.c.b16 %v394, %v393
    %v410 = vpack.c.b16 %v396, %v395
    %v411 = vpack.c.b16 %v398, %v397
    %v412 = vpack.c.b16 %v400, %v399
    %v413 = vpack.c.b16 %v402, %v401
    %v414 = vpack.c.b16 %v404, %v403
    %v415 = vpack.c.b16 %v406, %v405
    %v416 = vpack.c.b16 %v408, %v407
    %425 = vmatprep.subr.bf16.mxu0 0
    %426 = vmatpush1.bf16.msra.mxu0 %v416
    %427 = vmatprep.subr.bf16.mxu0 0
    %428 = vmatpush1.bf16.msra.mxu0 %v415
    %429 = vmatprep.subr.bf16.mxu0 0
    %430 = vmatpush1.bf16.msra.mxu0 %v414
    %431 = vmatprep.subr.bf16.mxu0 0
    %432 = vmatpush1.bf16.msra.mxu0 %v413
    %433 = vmatprep.subr.bf16.mxu0 0
    %434 = vmatpush1.bf16.msra.mxu0 %v412
    %435 = vmatprep.subr.bf16.mxu0 0
    %436 = vmatpush1.bf16.msra.mxu0 %v411
    %437 = vmatprep.subr.bf16.mxu0 0
    %438 = vmatpush1.bf16.msra.mxu0 %v410
    %439 = vmatprep.subr.bf16.mxu0 0
    %440 = vmatpush1.bf16.msra.mxu0 %v409
    %441 = vmatprep.subr.bf16.mxu0 0
    %442 = vmatpush2.bf16.msra.mxu0 0
    %443 = vmatprep.subr.bf16.mxu0 0
    %444 = vmatpush2.bf16.msra.mxu0 0
    %445 = vmatprep.subr.bf16.mxu0 0
    %446 = vmatpush2.bf16.msra.mxu0 0
    %447 = vmatprep.subr.bf16.mxu0 0
    %448 = vmatpush2.bf16.msra.mxu0 0
    %449 = vmatprep.subr.bf16.mxu0 0
    %450 = vmatpush2.bf16.msra.mxu0 0
    %451 = vmatprep.subr.bf16.mxu0 0
    %452 = vmatpush2.bf16.msra.mxu0 0
    %453 = vmatprep.subr.bf16.mxu0 0
    %454 = vmatpush2.bf16.msra.mxu0 0
    %455 = vmatprep.subr.bf16.mxu0 0
    %456 = vmatpush2.bf16.msra.mxu0 0
    %457 = vmatprep.mubr.bf16.mxu0 0
    %458 = vmatmul.mubr.bf16.gmra.mxu0 %v356
    %v459 = vpop.f32.mrf.mxu0
    %v460 = vadd.f32 %v376, %v459
    %v461 = vpop.f32.mrf.mxu0
    %v462 = vpop.f32.mrf.mxu0
    %v463 = vpop.f32.mrf.mxu0
    %464 = vdwg.mxu0
    %v465 = vmax.f32 %v460, 0.0
    %v466 = vpack.c.bf16 %v465, %v465
    %v467 = vld [vmem:[#allocation11] sm:$0xf]
    %v468 = vld [vmem:[#allocation11 + $0x4] sm:$0xf]
    %v469 = vld [vmem:[#allocation11 + $0x8] sm:$0xf]
    %v470 = vld [vmem:[#allocation11 + $0xc] sm:$0xf]
    %v471 = vld [vmem:[#allocation11 + $0x10] sm:$0xf]
    %v472 = vld [vmem:[#allocation11 + $0x14] sm:$0xf]
    %v473 = vld [vmem:[#allocation11 + $0x18] sm:$0xf]
    %v474 = vld [vmem:[#allocation11 + $0x1c] sm:$0xf]
    %v475 = vld [vmem:[#allocation11 + $0x20] sm:$0xf]
    %v476 = vld [vmem:[#allocation11 + $0x24] sm:$0xf]
    %v477 = vld [vmem:[#allocation11 + $0x28] sm:$0xf]
    %v478 = vld [vmem:[#allocation11 + $0x2c] sm:$0xf]
    %v479 = vld [vmem:[#allocation11 + $0x30] sm:$0xf]
    %v480 = vld [vmem:[#allocation11 + $0x34] sm:$0xf]
    %v481 = vld [vmem:[#allocation11 + $0x38] sm:$0xf]
    %v482 = vld [vmem:[#allocation11 + $0x3c] sm:$0xf]
    %v483 = vlaneseq
    %v484 = vshrl.u32 %v483, 7
    %v485 = vsub.s32 2, %v484
    %v486 = vrot.slane %v123, %v485
    %v503 = vunpack.c.l.b16 %v467
    %v504 = vunpack.c.l.b16 %v468
    %v505 = vunpack.c.l.b16 %v469
    %v506 = vunpack.c.l.b16 %v470
    %v507 = vunpack.c.l.b16 %v471
    %v508 = vunpack.c.l.b16 %v472
    %v509 = vunpack.c.l.b16 %v473
    %v510 = vunpack.c.l.b16 %v474
    %v511 = vunpack.c.l.b16 %v475
    %v512 = vunpack.c.l.b16 %v476
    %v513 = vunpack.c.l.b16 %v477
    %v514 = vunpack.c.l.b16 %v478
    %v515 = vunpack.c.l.b16 %v479
    %v516 = vunpack.c.l.b16 %v480
    %v517 = vunpack.c.l.b16 %v481
    %v518 = vunpack.c.l.b16 %v482
    %v519 = vpack.c.b16 %v504, %v503
    %v520 = vpack.c.b16 %v506, %v505
    %v521 = vpack.c.b16 %v508, %v507
    %v522 = vpack.c.b16 %v510, %v509
    %v523 = vpack.c.b16 %v512, %v511
    %v524 = vpack.c.b16 %v514, %v513
    %v525 = vpack.c.b16 %v516, %v515
    %v526 = vpack.c.b16 %v518, %v517
    %535 = vmatprep.subr.bf16.mxu0 0
    %536 = vmatpush1.bf16.msra.mxu0 %v526
    %537 = vmatprep.subr.bf16.mxu0 0
    %538 = vmatpush1.bf16.msra.mxu0 %v525
    %539 = vmatprep.subr.bf16.mxu0 0
    %540 = vmatpush1.bf16.msra.mxu0 %v524
    %541 = vmatprep.subr.bf16.mxu0 0
    %542 = vmatpush1.bf16.msra.mxu0 %v523
    %543 = vmatprep.subr.bf16.mxu0 0
    %544 = vmatpush1.bf16.msra.mxu0 %v522
    %545 = vmatprep.subr.bf16.mxu0 0
    %546 = vmatpush1.bf16.msra.mxu0 %v521
    %547 = vmatprep.subr.bf16.mxu0 0
    %548 = vmatpush1.bf16.msra.mxu0 %v520
    %549 = vmatprep.subr.bf16.mxu0 0
    %550 = vmatpush1.bf16.msra.mxu0 %v519
    %551 = vmatprep.subr.bf16.mxu0 0
    %552 = vmatpush2.bf16.msra.mxu0 0
    %553 = vmatprep.subr.bf16.mxu0 0
    %554 = vmatpush2.bf16.msra.mxu0 0
    %555 = vmatprep.subr.bf16.mxu0 0
    %556 = vmatpush2.bf16.msra.mxu0 0
    %557 = vmatprep.subr.bf16.mxu0 0
    %558 = vmatpush2.bf16.msra.mxu0 0
    %559 = vmatprep.subr.bf16.mxu0 0
    %560 = vmatpush2.bf16.msra.mxu0 0
    %561 = vmatprep.subr.bf16.mxu0 0
    %562 = vmatpush2.bf16.msra.mxu0 0
    %563 = vmatprep.subr.bf16.mxu0 0
    %564 = vmatpush2.bf16.msra.mxu0 0
    %565 = vmatprep.subr.bf16.mxu0 0
    %566 = vmatpush2.bf16.msra.mxu0 0
    %567 = vmatprep.mubr.bf16.mxu0 0
    %568 = vmatmul.mubr.bf16.gmra.mxu0 %v466
    %v569 = vpop.f32.mrf.mxu0
    %v570 = vadd.f32 %v486, %v569
    %v571 = vpop.f32.mrf.mxu0
    %v572 = vpop.f32.mrf.mxu0
    %v573 = vpop.f32.mrf.mxu0
    %574 = vdwg.mxu0
    %v575 = vmax.f32 %v570, 0.0
    %v576 = vpack.c.bf16 %v575, %v575
    %v577 = vlaneseq
    %v578 = vshrl.u32 %v577, 7
    %v579 = vsub.s32 3, %v578
    %v580 = vrot.slane %v123, %v579
    %v597 = vunpack.c.l.b16 %v124
    %v598 = vunpack.c.l.b16 %v125
    %v599 = vunpack.c.l.b16 %v126
    %v600 = vunpack.c.l.b16 %v127
    %v601 = vunpack.c.l.b16 %v128
    %v602 = vunpack.c.l.b16 %v129
    %v603 = vunpack.c.l.b16 %v130
    %v604 = vunpack.c.l.b16 %v131
    %v605 = vunpack.c.l.b16 %v132
    %v606 = vunpack.c.l.b16 %v133
    %v607 = vunpack.c.l.b16 %v134
    %v608 = vunpack.c.l.b16 %v135
    %v609 = vunpack.c.l.b16 %v136
    %v610 = vunpack.c.l.b16 %v137
    %v611 = vunpack.c.l.b16 %v138
    %v612 = vunpack.c.l.b16 %v139
    %v613 = vpack.c.b16 %v598, %v597
    %v614 = vpack.c.b16 %v600, %v599
    %v615 = vpack.c.b16 %v602, %v601
    %v616 = vpack.c.b16 %v604, %v603
    %v617 = vpack.c.b16 %v606, %v605
    %v618 = vpack.c.b16 %v608, %v607
    %v619 = vpack.c.b16 %v610, %v609
    %v620 = vpack.c.b16 %v612, %v611
    %629 = vmatprep.subr.bf16.mxu0 0
    %630 = vmatpush1.bf16.msra.mxu0 %v620
    %631 = vmatprep.subr.bf16.mxu0 0
    %632 = vmatpush1.bf16.msra.mxu0 %v619
    %633 = vmatprep.subr.bf16.mxu0 0
    %634 = vmatpush1.bf16.msra.mxu0 %v618
    %635 = vmatprep.subr.bf16.mxu0 0
    %636 = vmatpush1.bf16.msra.mxu0 %v617
    %637 = vmatprep.subr.bf16.mxu0 0
    %638 = vmatpush1.bf16.msra.mxu0 %v616
    %639 = vmatprep.subr.bf16.mxu0 0
    %640 = vmatpush1.bf16.msra.mxu0 %v615
    %641 = vmatprep.subr.bf16.mxu0 0
    %642 = vmatpush1.bf16.msra.mxu0 %v614
    %643 = vmatprep.subr.bf16.mxu0 0
    %644 = vmatpush1.bf16.msra.mxu0 %v613
    %645 = vmatprep.subr.bf16.mxu0 0
    %646 = vmatpush2.bf16.msra.mxu0 0
    %647 = vmatprep.subr.bf16.mxu0 0
    %648 = vmatpush2.bf16.msra.mxu0 0
    %649 = vmatprep.subr.bf16.mxu0 0
    %650 = vmatpush2.bf16.msra.mxu0 0
    %651 = vmatprep.subr.bf16.mxu0 0
    %652 = vmatpush2.bf16.msra.mxu0 0
    %653 = vmatprep.subr.bf16.mxu0 0
    %654 = vmatpush2.bf16.msra.mxu0 0
    %655 = vmatprep.subr.bf16.mxu0 0
    %656 = vmatpush2.bf16.msra.mxu0 0
    %657 = vmatprep.subr.bf16.mxu0 0
    %658 = vmatpush2.bf16.msra.mxu0 0
    %659 = vmatprep.subr.bf16.mxu0 0
    %660 = vmatpush2.bf16.msra.mxu0 0
    %661 = vmatprep.mubr.bf16.mxu0 0
    %662 = vmatmul.mubr.bf16.gmra.mxu0 %v576
    %v663 = vpop.f32.mrf.mxu0
    %v664 = vadd.f32 %v580, %v663
    %v665 = vpop.f32.mrf.mxu0
    %v666 = vpop.f32.mrf.mxu0
    %v667 = vpop.f32.mrf.mxu0
    %668 = vdwg.mxu0
    %v669 = vmax.f32 %v664, 0.0
    %v670 = vpack.c.bf16 %v669, %v669
    %v671 = vlaneseq
    %v672 = vshrl.u32 %v671, 7
    %v673 = vsub.s32 4, %v672
    %v674 = vrot.slane %v123, %v673
    %v675 = vunpack.c.h.b16 %v124
    %v676 = vunpack.c.h.b16 %v125
    %v677 = vunpack.c.h.b16 %v126
    %v678 = vunpack.c.h.b16 %v127
    %v679 = vunpack.c.h.b16 %v128
    %v680 = vunpack.c.h.b16 %v129
    %v681 = vunpack.c.h.b16 %v130
    %v682 = vunpack.c.h.b16 %v131
    %v683 = vunpack.c.h.b16 %v132
    %v684 = vunpack.c.h.b16 %v133
    %v685 = vunpack.c.h.b16 %v134
    %v686 = vunpack.c.h.b16 %v135
    %v687 = vunpack.c.h.b16 %v136
    %v688 = vunpack.c.h.b16 %v137
    %v689 = vunpack.c.h.b16 %v138
    %v690 = vunpack.c.h.b16 %v139
    %v691 = vpack.c.b16 %v676, %v675
    %v692 = vpack.c.b16 %v678, %v677
    %v693 = vpack.c.b16 %v680, %v679
    %v694 = vpack.c.b16 %v682, %v681
    %v695 = vpack.c.b16 %v684, %v683
    %v696 = vpack.c.b16 %v686, %v685
    %v697 = vpack.c.b16 %v688, %v687
    %v698 = vpack.c.b16 %v690, %v689
    %707 = vmatprep.subr.bf16.mxu0 0
    %708 = vmatpush1.bf16.msra.mxu0 %v698
    %709 = vmatprep.subr.bf16.mxu0 0
    %710 = vmatpush1.bf16.msra.mxu0 %v697
    %711 = vmatprep.subr.bf16.mxu0 0
    %712 = vmatpush1.bf16.msra.mxu0 %v696
    %713 = vmatprep.subr.bf16.mxu0 0
    %714 = vmatpush1.bf16.msra.mxu0 %v695
    %715 = vmatprep.subr.bf16.mxu0 0
    %716 = vmatpush1.bf16.msra.mxu0 %v694
    %717 = vmatprep.subr.bf16.mxu0 0
    %718 = vmatpush1.bf16.msra.mxu0 %v693
    %719 = vmatprep.subr.bf16.mxu0 0
    %720 = vmatpush1.bf16.msra.mxu0 %v692
    %721 = vmatprep.subr.bf16.mxu0 0
    %722 = vmatpush1.bf16.msra.mxu0 %v691
    %723 = vmatprep.subr.bf16.mxu0 0
    %724 = vmatpush2.bf16.msra.mxu0 0
    %725 = vmatprep.subr.bf16.mxu0 0
    %726 = vmatpush2.bf16.msra.mxu0 0
    %727 = vmatprep.subr.bf16.mxu0 0
    %728 = vmatpush2.bf16.msra.mxu0 0
    %729 = vmatprep.subr.bf16.mxu0 0
    %730 = vmatpush2.bf16.msra.mxu0 0
    %731 = vmatprep.subr.bf16.mxu0 0
    %732 = vmatpush2.bf16.msra.mxu0 0
    %733 = vmatprep.subr.bf16.mxu0 0
    %734 = vmatpush2.bf16.msra.mxu0 0
    %735 = vmatprep.subr.bf16.mxu0 0
    %736 = vmatpush2.bf16.msra.mxu0 0
    %737 = vmatprep.subr.bf16.mxu0 0
    %738 = vmatpush2.bf16.msra.mxu0 0
    %739 = vmatprep.mubr.bf16.mxu0 0
    %740 = vmatmul.mubr.bf16.gmra.mxu0 %v670
    %v741 = vpop.f32.mrf.mxu0
    %v742 = vadd.f32 %v674, %v741
    %v743 = vpop.f32.mrf.mxu0
    %v744 = vpop.f32.mrf.mxu0
    %v745 = vpop.f32.mrf.mxu0
    %746 = vdwg.mxu0
    %v747 = vtanh.pop %v742
    %748 = vst [vmem:[#allocation14] sm:$0xff] %v747
    // Predicated region
    $region62: #{tpu_custom_call.1} parent=1 // pred_check
      _
    $region63: #{tpu_custom_call.1} parent=1 // pred_check_branch
      %750 = sbr.rel (0) target = $region65
    $region64: #{tpu_custom_call.1} parent=1 // pred_region
      %s752 = ssub.s32 128, 128
      %753 = vsyncadd [#allocation4], %s752
      %s755 = sshll.u32 [#allocation14], 4
      %s756 = int_to_ptr.vmem [resolvable:$true] %s755
      %758 = dma.vmem_to_hbm [thread:$0]  %s756, 128, %s8, [#allocation4]
    $region65: #{tpu_custom_call.1} parent=1 // pred_fallthru
      _
    // Predicated region
    $region66: #{tpu_custom_call.1} parent=1 // pred_check
      _
    $region67: #{tpu_custom_call.1} parent=1 // pred_check_branch
      %760 = sbr.rel (0) target = $region69
    $region68: #{tpu_custom_call.1} parent=1 // pred_region
      %761 = dma.done [#allocation4], 128
    $region69: #{tpu_custom_call.1} parent=1 // pred_fallthru
      _
    %762 = vsyncpa [#allocation3], 1
    %763 = vsyncpa [#allocation6], 1
    %764 = vsyncpa [#allocation9], 1
    %765 = vsyncpa [#allocation12], 1
    %766 = vsyncpa [#allocation4], 1

</llo_original>
